<compile_context>
chip_gen: v6e
topology: v6e:2x2x1
jax: 0.10.0
libtpu: 0.0.40
codegen_flags: <defaults>
</compile_context>

<pallas_src>
import functools

import jax
import jax.numpy as jnp
from jax.experimental import pallas as pl
from jax.experimental.pallas import tpu as pltpu


_STATIC_LOOP_MAX_T = 16   # <= this: unroll recurrence with static (Python) indices
_RNN_UNROLL = 4           # bounded unroll for the fori_loop path (large T)
_MAX_BT = 256             # vreg-pressure cap on the loop-carried (bt, H) hidden state


def _actor_critic_kernel(x_ref, h0_ref, wih_ref, whh_ref, whead_ref,
                         out_ref, hout_ref, xw_scr, h_scr):
    """One batch tile of the ActorCritic forward (time-major inside the kernel).

    x_ref:     (T, bt, D)  input, time-major, compute dtype
    h0_ref:    (bt, H)     initial hidden state (f32)
    wih_ref:   (D, H)      input->hidden weight (pre-transposed, compute dtype)
    whh_ref:   (H, H)      hidden->hidden weight (pre-transposed, compute dtype)
    whead_ref: (H, P)      fused [actor | critic] head weight (pre-transposed)
    out_ref:   (T, bt, P)  fused head output (f32): [..., :A]=actor, [..., A:]=critic
    hout_ref:  (bt, H)     final hidden state (f32)
    xw_scr:    (T, bt, H)  VMEM scratch: hoisted input projection (f32)
    h_scr:     (T, bt, H)  VMEM scratch: per-step hidden states (compute dtype)
    """
    T, bt, D = x_ref.shape
    H = whh_ref.shape[0]
    P = whead_ref.shape[1]
    cdt = wih_ref.dtype  # MXU operand dtype (bf16 or f32); accumulation is f32

    # ---- 1) Hoisted input projection: one (T*bt, D) @ (D, H) MXU call --------
    x2 = x_ref[...].reshape(T * bt, D)                 # leading-dim collapse, cheap
    xw = jnp.dot(x2, wih_ref[...], preferred_element_type=jnp.float32)
    xw_scr[...] = xw.reshape(T, bt, H)                 # f32 pre-activation term

    whh = whh_ref[...]                                 # tiny; resident across the loop

    # ---- 2) Recurrence: only h @ W_hh (+ precomputed xw[t]) per step ---------
    # Time-major scratches -> dense leading-axis slices on the serial path.
    def step(t, h):
        pre = xw_scr[t] + jnp.dot(h.astype(cdt), whh,
                                  preferred_element_type=jnp.float32)
        h_new = jnp.tanh(pre)                          # f32 tanh / f32 carry
        h_scr[t] = h_new.astype(h_scr.dtype)           # history stored in compute dtype
        return h_new

    h0 = h0_ref[...]
    if T <= _STATIC_LOOP_MAX_T:
        h = h0
        for t in range(T):                             # static indices; cheap at small T
            h = step(t, h)
    else:
        h = jax.lax.fori_loop(0, T, step, h0, unroll=_RNN_UNROLL)
    hout_ref[...] = h

    # ---- 3) Fused actor/critic heads: one (T*bt, H) @ (H, P) MXU call --------
    h_all = h_scr[...].reshape(T * bt, H)              # already in compute dtype
    head = jnp.dot(h_all, whead_ref[...], preferred_element_type=jnp.float32)
    out_ref[...] = head.reshape(T, bt, P)


# --------------------------- tiling / VMEM sizing ------------------------------

def _round_up(v, m):
    return ((v + m - 1) // m) * m


def _vmem_budget():
    """Generation-aware (scoped budget, vmem_limit_bytes)."""
    try:
        cap = pltpu.get_tpu_info().vmem_capacity_bytes
    except Exception:
        cap = 64 * 1024 * 1024                          # conservative (v7x-class) fallback
    if cap <= 64 * 1024 * 1024:                         # v7x: 64 MiB per TensorCore
        return 24 * 1024 * 1024, 48 * 1024 * 1024
    return 48 * 1024 * 1024, 96 * 1024 * 1024           # v5e/v6e: 128 MiB per TC


def _vmem_estimate(bt, T, D, H, P, cb):
    """Padded per-grid-step VMEM footprint (double-buffered tiles + scratch + temps)."""
    lane = lambda n: _round_up(n, 128)
    sub_c = max(8, 32 // cb)                             # sublane pad: 8 (f32) / 16 (bf16)
    x_tile = T * _round_up(bt, sub_c) * lane(D) * cb
    h0_tile = _round_up(bt, 8) * lane(H) * 4
    w_tiles = (_round_up(D, sub_c) * lane(H)
               + _round_up(H, sub_c) * lane(H)
               + _round_up(H, sub_c) * lane(P)) * cb
    out_tile = T * _round_up(bt, 8) * lane(P) * 4        # lane-padded to 128!
    hout_tile = _round_up(bt, 8) * lane(H) * 4
    dbuf = 2 * (x_tile + h0_tile + w_tiles + out_tile + hout_tile)
    xw_scr = T * _round_up(bt, 8) * lane(H) * 4          # f32 scratch
    h_scr = T * _round_up(bt, sub_c) * lane(H) * cb      # compute-dtype scratch
    # in-kernel temporaries: f32 xw value, f32 head value, cdt x2 cast/reshape
    tmps = (2 * _round_up(T * bt, 8) * lane(H) * 4
            + _round_up(T * bt, sub_c) * lane(D) * cb)
    return int((dbuf + xw_scr + h_scr + tmps) * 1.25)    # regalloc / compiler margin


def _pick_batch_tile(B, T, D, H, P, cdt_bytes, budget):
    """Largest legal batch tile (multiple of 8, or the full B) fitting the budget."""
    def fits(bt):
        return _vmem_estimate(bt, T, D, H, P, cdt_bytes) <= budget

    cap = min(B, _MAX_BT)
    if B >= 16:
        # Keep >= 2 grid tiles: megacore sharding on v7x, DMA/compute overlap elsewhere.
        cap = min(cap, max(8, (B // 2) // 8 * 8))
    if cap == B and fits(B):
        return B
    bt = max(8, (cap // 8) * 8)
    while bt > 8 and not fits(bt):
        bt -= 8
    return min(bt, B)


# --------------------------------- wrapper -------------------------------------

@functools.partial(jax.jit, static_argnames=("compute_dtype",))
def actor_critic_forward(x, hx, params, compute_dtype=jnp.bfloat16):
    """Mirror of ActorCritic.forward(x, hx).

    x:  (B, T, D) float32 (batch_first, like PyTorch);  hx: (1, B, H) float32.
    Returns (actor_logits, critic_value, h) with PyTorch's shapes
    (dim 1 squeezed only when T == 1, exactly like torch.squeeze(1)).
    """
    B, T, D = x.shape
    H = hx.shape[-1]
    A = params["w_actor"].shape[0]
    P = A + 1                                        # fused [actor | critic] width

    cdt = compute_dtype
    cb = jnp.dtype(cdt).itemsize
    x_t = jnp.transpose(x, (1, 0, 2)).astype(cdt)    # (T, B, D) time-major, compute dtype
    h0 = hx[0].astype(jnp.float32)                   # (B, H)
    wih_t = params["w_ih"].T.astype(cdt)             # (D, H)
    whh_t = params["w_hh"].T.astype(cdt)             # (H, H)
    w_head = jnp.concatenate(
        [params["w_actor"].T, params["w_critic"].T], axis=1).astype(cdt)  # (H, P)

    budget, vmem_limit = _vmem_budget()
    bt = _pick_batch_tile(B, T, D, H, P, cb, budget)
    grid = (pl.cdiv(B, bt),)

    head_out, h_out = pl.pallas_call(
        _actor_critic_kernel,
        out_shape=(
            jax.ShapeDtypeStruct((T, B, P), jnp.float32),
            jax.ShapeDtypeStruct((B, H), jnp.float32),
        ),
        grid=grid,
        in_specs=[
            pl.BlockSpec((T, bt, D), lambda i: (0, i, 0)),
            pl.BlockSpec((bt, H), lambda i: (i, 0)),
            pl.BlockSpec((D, H), lambda i: (0, 0)),
            pl.BlockSpec((H, H), lambda i: (0, 0)),
            pl.BlockSpec((H, P), lambda i: (0, 0)),
        ],
        out_specs=(
            pl.BlockSpec((T, bt, P), lambda i: (0, i, 0)),
            pl.BlockSpec((bt, H), lambda i: (i, 0)),
        ),
        scratch_shapes=[
            pltpu.VMEM((T, bt, H), jnp.float32),     # hoisted input projection (f32)
            pltpu.VMEM((T, bt, H), cdt),             # hidden-state history (compute dtype)
        ],
        compiler_params=pltpu.CompilerParams(
            dimension_semantics=("parallel",),       # batch tiles are independent
            vmem_limit_bytes=vmem_limit,
        ),
    )(x_t, h0, wih_t, whh_t, w_head)

    head_out = jnp.transpose(head_out, (1, 0, 2))    # tiny (B, T, P) array
    actor = head_out[..., :A]                        # (B, T, A)
    critic = head_out[..., A:A + 1]                  # (B, T, 1)
    if T == 1:                                       # torch .squeeze(1)
        actor = actor[:, 0, :]
        critic = critic[:, 0, :]
    return actor, critic, h_out[None]                # h: (1, B, H)


# -------------------------------- reference ------------------------------------

def reference_forward(x, hx, params, compute_dtype=jnp.float32):
    """Pure-JAX mirror of the PyTorch forward (matmul operands cast to
    compute_dtype, f32 accumulation and f32 tanh — same recipe as the kernel)."""
    B, T, D = x.shape
    H = hx.shape[-1]
    cdt = compute_dtype
    wih = params["w_ih"].T.astype(cdt)
    whh = params["w_hh"].T.astype(cdt)
    wa = params["w_actor"].T.astype(cdt)
    wc = params["w_critic"].T.astype(cdt)
    h = hx[0].astype(jnp.float32)
    hs = []
    for t in range(T):
        pre = (jnp.dot(x[:, t, :].astype(cdt), wih, preferred_element_type=jnp.float32)
               + jnp.dot(h.astype(cdt), whh, preferred_element_type=jnp.float32))
        h = jnp.tanh(pre)
        hs.append(h)
    r = jnp.stack(hs, axis=1)                        # (B, T, H)
    r2 = r.reshape(B * T, H).astype(cdt)
    actor = jnp.dot(r2, wa, preferred_element_type=jnp.float32).reshape(B, T, -1)
    critic = jnp.dot(r2, wc, preferred_element_type=jnp.float32).reshape(B, T, 1)
    if T == 1:
        actor = actor[:, 0, :]
        critic = critic[:, 0, :]
    return actor, critic, h[None]


if __name__ == "__main__":
    GAIN = 1.5

    def make_params(key, D, H, A):
        k1, k2, k3, k4 = jax.random.split(key, 4)
        # Matches ActorCritic.init_weights (bias=False).
        return {
            "w_ih": jax.random.normal(k1, (H, D), jnp.float32) * (1.0 / D ** 0.5),
            "w_hh": jax.random.normal(k2, (H, H), jnp.float32) * (GAIN / H ** 0.5),
            "w_actor": jax.random.normal(k3, (A, H), jnp.float32) * (1.0 / H),
            "w_critic": jax.random.normal(k4, (1, H), jnp.float32) * (1.0 / H),
        }

    # --- Config 1: single-step (T == 1 -> squeeze(1) path), f32 numerics check.
    B, T, D, H, A = 8, 1, 16, 32, 4
    kp, kx, kh = jax.random.split(jax.random.PRNGKey(0), 3)
    params = make_params(kp, D, H, A)
    x = jax.random.normal(kx, (B, T, D), jnp.float32)
    hx = jax.random.normal(kh, (1, B, H), jnp.float32)

    actor, critic, h = actor_critic_forward(x, hx, params, compute_dtype=jnp.float32)
    jax.block_until_ready((actor, critic, h))
    a_ref, c_ref, h_ref = reference_forward(x, hx, params, compute_dtype=jnp.float32)
    assert actor.shape == a_ref.shape == (B, A)
    assert critic.shape == c_ref.shape == (B, 1)
    assert h.shape == h_ref.shape == (1, B, H)
    assert jnp.allclose(actor, a_ref, atol=1e-4, rtol=1e-4)
    assert jnp.allclose(critic, c_ref, atol=1e-4, rtol=1e-4)
    assert jnp.allclose(h, h_ref, atol=1e-4, rtol=1e-4)

    # --- Config 2: multi-step rollout (T > 1), bf16 MXU operands / f32 accum.
    B, T, D, H, A = 4, 8, 16, 32, 4
    kp, kx, _ = jax.random.split(jax.random.PRNGKey(1), 3)
    params = make_params(kp, D, H, A)
    x = jax.random.normal(kx, (B, T, D), jnp.float32)
    hx = jnp.zeros((1, B, H), jnp.float32)

    actor, critic, h = actor_critic_forward(x, hx, params, compute_dtype=jnp.bfloat16)
    jax.block_until_ready((actor, critic, h))
    a_ref, c_ref, h_ref = reference_forward(x, hx, params, compute_dtype=jnp.bfloat16)
    assert actor.shape == a_ref.shape == (B, T, A)
    assert critic.shape == c_ref.shape == (B, T, 1)
    assert h.shape == h_ref.shape == (1, B, H)
    assert jnp.allclose(actor, a_ref, atol=1e-3, rtol=1e-3)
    assert jnp.allclose(critic, c_ref, atol=1e-3, rtol=1e-3)
    assert jnp.allclose(h, h_ref, atol=1e-3, rtol=1e-3)

    # --- Config 3: larger batch -> multi-tile grid (>=2 grid steps, megacore path).
    B, T, D, H, A = 32, 8, 16, 32, 4
    kp, kx, kh = jax.random.split(jax.random.PRNGKey(2), 3)
    params = make_params(kp, D, H, A)
    x = jax.random.normal(kx, (B, T, D), jnp.float32)
    hx = jax.random.normal(kh, (1, B, H), jnp.float32)

    actor, critic, h = actor_critic_forward(x, hx, params, compute_dtype=jnp.bfloat16)
    jax.block_until_ready((actor, critic, h))
    a_ref, c_ref, h_ref = reference_forward(x, hx, params, compute_dtype=jnp.bfloat16)
    assert actor.shape == a_ref.shape == (B, T, A)
    assert critic.shape == c_ref.shape == (B, T, 1)
    assert h.shape == h_ref.shape == (1, B, H)
    assert jnp.allclose(actor, a_ref, atol=1e-3, rtol=1e-3)
    assert jnp.allclose(critic, c_ref, atol=1e-3, rtol=1e-3)
    assert jnp.allclose(h, h_ref, atol=1e-3, rtol=1e-3)

    print("KERNEL_OK")
</pallas_src>

<mosaic_0001>
module attributes {stable_mosaic.version = 11 : i64} {
  func.func @_actor_critic_kernel(%arg0: i32, %arg1: memref<1x8x16xf32, #tpu.memory_space<vmem>>, %arg2: memref<8x32xf32, #tpu.memory_space<vmem>>, %arg3: memref<16x32xf32, #tpu.memory_space<vmem>>, %arg4: memref<32x32xf32, #tpu.memory_space<vmem>>, %arg5: memref<32x5xf32, #tpu.memory_space<vmem>>, %arg6: memref<1x8x5xf32, #tpu.memory_space<vmem>>, %arg7: memref<8x32xf32, #tpu.memory_space<vmem>>, %arg8: memref<1x8x32xf32, #tpu.memory_space<vmem>>, %arg9: memref<1x8x32xf32, #tpu.memory_space<vmem>>) attributes {dimension_semantics = [#tpu.dimension_semantics<parallel>], iteration_bounds = array<i64: 1>, scalar_prefetch = 0 : i64, scratch_operands = 2 : i64, tpu.core_type = #tpu.core_type<tc>, window_params = [{transform_indices = @transform_0, window_bounds = array<i64: 1, 8, 16>}, {transform_indices = @transform_1, window_bounds = array<i64: 8, 32>}, {pipeline_mode = #tpu.pipeline_mode<synchronous>, transform_indices = @transform_2, window_bounds = array<i64: 16, 32>}, {pipeline_mode = #tpu.pipeline_mode<synchronous>, transform_indices = @transform_3, window_bounds = array<i64: 32, 32>}, {pipeline_mode = #tpu.pipeline_mode<synchronous>, transform_indices = @transform_4, window_bounds = array<i64: 32, 5>}, {transform_indices = @transform_5, window_bounds = array<i64: 1, 8, 5>}, {transform_indices = @transform_6, window_bounds = array<i64: 8, 32>}]} {
    %c0 = arith.constant 0 : index
    %c0_0 = arith.constant 0 : index
    %c0_1 = arith.constant 0 : index
    %0 = vector.load %arg1[%c0, %c0_0, %c0_1] : memref<1x8x16xf32, #tpu.memory_space<vmem>>, vector<1x8x16xf32>
    %1 = vector.shape_cast %0 : vector<1x8x16xf32> to vector<8x16xf32>
    %c0_2 = arith.constant 0 : index
    %c0_3 = arith.constant 0 : index
    %2 = vector.load %arg3[%c0_2, %c0_3] : memref<16x32xf32, #tpu.memory_space<vmem>>, vector<16x32xf32>
    %cst = arith.constant dense<0.000000e+00> : vector<8x32xf32>
    %3 = tpu.matmul %1, %2, %cst {dimension_numbers = #tpu.dot_dimension_numbers<[1], [0], [0], [1], [0, 0, 1, 1], [], []>} : vector<8x16xf32>, vector<16x32xf32>, vector<8x32xf32> -> vector<8x32xf32>
    %4 = vector.shape_cast %3 : vector<8x32xf32> to vector<1x8x32xf32>
    %c0_4 = arith.constant 0 : index
    %c0_5 = arith.constant 0 : index
    %c0_6 = arith.constant 0 : index
    %5 = vector.load %arg8[%c0_4, %c0_5, %c0_6] : memref<1x8x32xf32, #tpu.memory_space<vmem>>, vector<1x8x32xf32>
    tpu.vector_store %arg8[%c0_4, %c0_5, %c0_6], %4 {strides = array<i32>} : memref<1x8x32xf32, #tpu.memory_space<vmem>>, vector<1x8x32xf32>,
    %c0_7 = arith.constant 0 : index
    %c0_8 = arith.constant 0 : index
    %6 = vector.load %arg4[%c0_7, %c0_8] : memref<32x32xf32, #tpu.memory_space<vmem>>, vector<32x32xf32>
    %c0_9 = arith.constant 0 : index
    %c0_10 = arith.constant 0 : index
    %7 = vector.load %arg2[%c0_9, %c0_10] : memref<8x32xf32, #tpu.memory_space<vmem>>, vector<8x32xf32>
    %c0_11 = arith.constant 0 : index
    %c0_12 = arith.constant 0 : index
    %c0_13 = arith.constant 0 : index
    %8 = vector.load %arg8[%c0_11, %c0_12, %c0_13] : memref<1x8x32xf32, #tpu.memory_space<vmem>>, vector<1x8x32xf32>
    %9 = vector.shape_cast %8 : vector<1x8x32xf32> to vector<8x32xf32>
    %cst_14 = arith.constant dense<0.000000e+00> : vector<8x32xf32>
    %10 = tpu.matmul %7, %6, %cst_14 {dimension_numbers = #tpu.dot_dimension_numbers<[1], [0], [0], [1], [0, 0, 1, 1], [], []>} : vector<8x32xf32>, vector<32x32xf32>, vector<8x32xf32> -> vector<8x32xf32>
    %11 = arith.addf %9, %10 : vector<8x32xf32>
    %12 = math.tanh %11 : vector<8x32xf32>
    %c0_15 = arith.constant 0 : index
    %c0_16 = arith.constant 0 : index
    %c0_17 = arith.constant 0 : index
    %13 = vector.load %arg9[%c0_15, %c0_16, %c0_17] : memref<1x8x32xf32, #tpu.memory_space<vmem>>, vector<1x8x32xf32>
    %14 = vector.shape_cast %13 : vector<1x8x32xf32> to vector<8x32xf32>
    %15 = vector.shape_cast %12 : vector<8x32xf32> to vector<1x8x32xf32>
    tpu.vector_store %arg9[%c0_15, %c0_16, %c0_17], %15 {strides = array<i32>} : memref<1x8x32xf32, #tpu.memory_space<vmem>>, vector<1x8x32xf32>,
    %c0_18 = arith.constant 0 : index
    %c0_19 = arith.constant 0 : index
    %16 = vector.load %arg7[%c0_18, %c0_19] : memref<8x32xf32, #tpu.memory_space<vmem>>, vector<8x32xf32>
    tpu.vector_store %arg7[%c0_18, %c0_19], %12 {strides = array<i32>} : memref<8x32xf32, #tpu.memory_space<vmem>>, vector<8x32xf32>,
    %c0_20 = arith.constant 0 : index
    %c0_21 = arith.constant 0 : index
    %c0_22 = arith.constant 0 : index
    %17 = vector.load %arg9[%c0_20, %c0_21, %c0_22] : memref<1x8x32xf32, #tpu.memory_space<vmem>>, vector<1x8x32xf32>
    %18 = vector.shape_cast %17 : vector<1x8x32xf32> to vector<8x32xf32>
    %c0_23 = arith.constant 0 : index
    %c0_24 = arith.constant 0 : index
    %19 = vector.load %arg5[%c0_23, %c0_24] : memref<32x5xf32, #tpu.memory_space<vmem>>, vector<32x5xf32>
    %cst_25 = arith.constant dense<0.000000e+00> : vector<8x5xf32>
    %20 = tpu.matmul %18, %19, %cst_25 {dimension_numbers = #tpu.dot_dimension_numbers<[1], [0], [0], [1], [0, 0, 1, 1], [], []>} : vector<8x32xf32>, vector<32x5xf32>, vector<8x5xf32> -> vector<8x5xf32>
    %21 = vector.shape_cast %20 : vector<8x5xf32> to vector<1x8x5xf32>
    %c0_26 = arith.constant 0 : index
    %c0_27 = arith.constant 0 : index
    %c0_28 = arith.constant 0 : index
    %22 = vector.load %arg6[%c0_26, %c0_27, %c0_28] : memref<1x8x5xf32, #tpu.memory_space<vmem>>, vector<1x8x5xf32>
    tpu.vector_store %arg6[%c0_26, %c0_27, %c0_28], %21 {strides = array<i32>} : memref<1x8x5xf32, #tpu.memory_space<vmem>>, vector<1x8x5xf32>,
    return
  }
  func.func @transform_0(%arg0: i32) -> (i32, i32, i32) {
    %c0_i32 = arith.constant 0 : i32
    %c0_i32_0 = arith.constant 0 : i32
    %c0_i32_1 = arith.constant 0 : i32
    return %c0_i32, %arg0, %c0_i32_0 : i32, i32, i32
  }
  func.func @transform_1(%arg0: i32) -> (i32, i32) {
    %c0_i32 = arith.constant 0 : i32
    %c0_i32_0 = arith.constant 0 : i32
    return %arg0, %c0_i32 : i32, i32
  }
  func.func @transform_2(%arg0: i32) -> (i32, i32) {
    %c0_i32 = arith.constant 0 : i32
    %c0_i32_0 = arith.constant 0 : i32
    %c0_i32_1 = arith.constant 0 : i32
    return %c0_i32, %c0_i32_0 : i32, i32
  }
  func.func @transform_3(%arg0: i32) -> (i32, i32) {
    %c0_i32 = arith.constant 0 : i32
    %c0_i32_0 = arith.constant 0 : i32
    %c0_i32_1 = arith.constant 0 : i32
    return %c0_i32, %c0_i32_0 : i32, i32
  }
  func.func @transform_4(%arg0: i32) -> (i32, i32) {
    %c0_i32 = arith.constant 0 : i32
    %c0_i32_0 = arith.constant 0 : i32
    %c0_i32_1 = arith.constant 0 : i32
    return %c0_i32, %c0_i32_0 : i32, i32
  }
  func.func @transform_5(%arg0: i32) -> (i32, i32, i32) {
    %c0_i32 = arith.constant 0 : i32
    %c0_i32_0 = arith.constant 0 : i32
    %c0_i32_1 = arith.constant 0 : i32
    return %c0_i32, %arg0, %c0_i32_0 : i32, i32, i32
  }
  func.func @transform_6(%arg0: i32) -> (i32, i32) {
    %c0_i32 = arith.constant 0 : i32
    %c0_i32_0 = arith.constant 0 : i32
    return %arg0, %c0_i32 : i32, i32
  }
}

</mosaic_0001>

<llo_original>
// kernel: actor_critic_forward.1
$region0: #{actor_critic_forward.1}
  #allocation0 [shape = 'u32[]', space=smem, size = 0x4, offset = 0x4, fixed_abs, tag = 'smem constant byte address 0x4 - core index']
  #allocation1 [shape = 'u32[144,128]{1,0:T(1,128)}', space=vmem, size = 0x12000, scoped, tag = 'internal scratch']
  #allocation2 [shape = 'f32[1,8,32]{2,1,0:T(8,128)}', space=vmem, size = 0x1000, scoped, tag = 'scratch operand']
  #allocation3 [shape = 'f32[1,8,32]{2,1,0:T(8,128)}', space=vmem, size = 0x1000, scoped, tag = 'scratch operand']
  %s0 = inlined_call_operand.vmem [shape: f32[1,8,16], index: 0, kind: input, shape index: {}]
  %s1 = inlined_call_operand.vmem [shape: f32[8,32], index: 1, kind: input, shape index: {}]
  %s2 = inlined_call_operand.vmem [shape: f32[16,32], index: 2, kind: input, shape index: {}]
  %s3 = inlined_call_operand.vmem [shape: f32[32,32], index: 3, kind: input, shape index: {}]
  %s4 = inlined_call_operand.vmem [shape: f32[32,5], index: 4, kind: input, shape index: {}]
  %s5 = inlined_call_operand.vmem [shape: f32[1,8,5], index: 5, kind: output, shape index: {0}]
  %s6 = inlined_call_operand.hbm [shape: f32[8,32], index: 6, kind: output, shape index: {1}]
  %7 = xla_tuple %s5, %s6
  %s8 = sld [smem:[#allocation0]]
  $region38: #{actor_critic_forward.1} parent=0
    _
  %s10 = ssub.s32 1, %s8
  %s11 = scalar_select 0, %s10, %s8
  $region1: #{actor_critic_forward.1} parent=0
    #allocation4 [shape = 'u8[4096]{0}', space=vmem, size = 0x1000, scoped, tag = 'output window, operand 1, single buffered']
    #allocation5 [shape = 's32[1]{0}', space=sflag, size = 0x4, scoped, tag = 'scoped memory for actor_critic_forward.1']
    %12 = vsyncpa [#allocation5], 0
    // Predicated region
    $region2: #{actor_critic_forward.1} parent=1 // pred_check
      _
    $region3: #{actor_critic_forward.1} parent=1 // pred_check_branch
      %14 = sbr.rel (0) target = $region5
    $region4: #{actor_critic_forward.1} parent=1 // pred_region
      _
    $region5: #{actor_critic_forward.1} parent=1 // pred_fallthru
      _
    // Predicated region
    $region6: #{actor_critic_forward.1} parent=1 // pred_check
      _
    $region7: #{actor_critic_forward.1} parent=1 // pred_check_branch
      %16 = sbr.rel (0) target = $region9
    $region8: #{actor_critic_forward.1} parent=1 // pred_region
      _
    $region9: #{actor_critic_forward.1} parent=1 // pred_fallthru
      _
    // Predicated region
    $region10: #{actor_critic_forward.1} parent=1 // pred_check
      _
    $region11: #{actor_critic_forward.1} parent=1 // pred_check_branch
      %18 = sbr.rel (0) target = $region13
    $region12: #{actor_critic_forward.1} parent=1 // pred_region
      _
    $region13: #{actor_critic_forward.1} parent=1 // pred_fallthru
      _
    // Predicated region
    $region14: #{actor_critic_forward.1} parent=1 // pred_check
      _
    $region15: #{actor_critic_forward.1} parent=1 // pred_check_branch
      %20 = sbr.rel (0) target = $region17
    $region16: #{actor_critic_forward.1} parent=1 // pred_region
      _
    $region17: #{actor_critic_forward.1} parent=1 // pred_fallthru
      _
    // Predicated region
    $region18: #{actor_critic_forward.1} parent=1 // pred_check
      _
    $region19: #{actor_critic_forward.1} parent=1 // pred_check_branch
      %22 = sbr.rel (0) target = $region21
    $region20: #{actor_critic_forward.1} parent=1 // pred_region
      _
    $region21: #{actor_critic_forward.1} parent=1 // pred_fallthru
      _
    %v23 = vld [vmem:[%s0] sm:$0xff]
    %v24 = vld [vmem:[%s2] sm:$0xff]
    %v25 = vld [vmem:[%s2 + $0x8] sm:$0xff]
    %vm26 = vcmask 130048
    %v28 = vsel %vm26, %v23, 0
    %30 = vmatprep.subr.mxu0 0.0
    %31 = vmatpush1.msra.mxu0 0.0
    %32 = vmatprep.subr.mxu0 0.0
    %33 = vmatpush1.msra.mxu0 0.0
    %34 = vmatprep.subr.mxu0 0.0
    %35 = vmatpush1.msra.mxu0 0.0
    %36 = vmatprep.subr.mxu0 0.0
    %37 = vmatpush1.msra.mxu0 0.0
    %38 = vmatprep.subr.mxu0 0.0
    %39 = vmatpush1.msra.mxu0 0.0
    %40 = vmatprep.subr.mxu0 0.0
    %41 = vmatpush1.msra.mxu0 0.0
    %42 = vmatprep.subr.mxu0 0.0
    %43 = vmatpush1.msra.mxu0 0.0
    %44 = vmatprep.subr.mxu0 0.0
    %45 = vmatpush1.msra.mxu0 0.0
    %46 = vmatprep.subr.mxu0 0.0
    %47 = vmatpush1.msra.mxu0 0.0
    %48 = vmatprep.subr.mxu0 0.0
    %49 = vmatpush1.msra.mxu0 0.0
    %50 = vmatprep.subr.mxu0 0.0
    %51 = vmatpush1.msra.mxu0 0.0
    %52 = vmatprep.subr.mxu0 0.0
    %53 = vmatpush1.msra.mxu0 0.0
    %54 = vmatprep.subr.mxu0 0.0
    %55 = vmatpush1.msra.mxu0 0.0
    %56 = vmatprep.subr.mxu0 0.0
    %57 = vmatpush1.msra.mxu0 0.0
    %58 = vmatprep.subr.mxu0 0.0
    %59 = vmatpush1.msra.mxu0 %v25
    %60 = vmatprep.subr.mxu0 0.0
    %61 = vmatpush1.msra.mxu0 %v24
    %62 = vmatprep.subr.mxu0 0.0
    %63 = vmatpush2.msra.mxu0 0.0
    %64 = vmatprep.subr.mxu0 0.0
    %65 = vmatpush2.msra.mxu0 0.0
    %66 = vmatprep.subr.mxu0 0.0
    %67 = vmatpush2.msra.mxu0 0.0
    %68 = vmatprep.subr.mxu0 0.0
    %69 = vmatpush2.msra.mxu0 0.0
    %70 = vmatprep.subr.mxu0 0.0
    %71 = vmatpush2.msra.mxu0 0.0
    %72 = vmatprep.subr.mxu0 0.0
    %73 = vmatpush2.msra.mxu0 0.0
    %74 = vmatprep.subr.mxu0 0.0
    %75 = vmatpush2.msra.mxu0 0.0
    %76 = vmatprep.subr.mxu0 0.0
    %77 = vmatpush2.msra.mxu0 0.0
    %78 = vmatprep.subr.mxu0 0.0
    %79 = vmatpush2.msra.mxu0 0.0
    %80 = vmatprep.subr.mxu0 0.0
    %81 = vmatpush2.msra.mxu0 0.0
    %82 = vmatprep.subr.mxu0 0.0
    %83 = vmatpush2.msra.mxu0 0.0
    %84 = vmatprep.subr.mxu0 0.0
    %85 = vmatpush2.msra.mxu0 0.0
    %86 = vmatprep.subr.mxu0 0.0
    %87 = vmatpush2.msra.mxu0 0.0
    %88 = vmatprep.subr.mxu0 0.0
    %89 = vmatpush2.msra.mxu0 0.0
    %90 = vmatprep.subr.mxu0 0.0
    %91 = vmatpush2.msra.mxu0 0.0
    %92 = vmatprep.subr.mxu0 0.0
    %93 = vmatpush2.msra.mxu0 0.0
    %94 = vmatprep.mubr.f32.mxu0 0.0
    %95 = vmatmul.mubr.f32.gmra.mxu0 %v28
    %v96 = vpop.f32.mrf.mxu0
    %v97 = vadd.f32 0.0, %v96
    %v98 = vpop.f32.mrf.mxu0
    %99 = vdwg.mxu0
    %vm100 = vcmask 261120
    %101 = vst.msk [vmem:[#allocation2] sm:$0xff] %vm100, %v97
    %v102 = vld [vmem:[%s3] sm:$0xff]
    %v103 = vld [vmem:[%s3 + $0x8] sm:$0xff]
    %v104 = vld [vmem:[%s3 + $0x10] sm:$0xff]
    %v105 = vld [vmem:[%s3 + $0x18] sm:$0xff]
    %v106 = vld [vmem:[%s1] sm:$0xff]
    %v107 = vld [vmem:[#allocation2] sm:$0xff]
    %v109 = vsel %vm100, %v106, 0
    %111 = vmatprep.subr.mxu0 0.0
    %112 = vmatpush1.msra.mxu0 0.0
    %113 = vmatprep.subr.mxu0 0.0
    %114 = vmatpush1.msra.mxu0 0.0
    %115 = vmatprep.subr.mxu0 0.0
    %116 = vmatpush1.msra.mxu0 0.0
    %117 = vmatprep.subr.mxu0 0.0
    %118 = vmatpush1.msra.mxu0 0.0
    %119 = vmatprep.subr.mxu0 0.0
    %120 = vmatpush1.msra.mxu0 0.0
    %121 = vmatprep.subr.mxu0 0.0
    %122 = vmatpush1.msra.mxu0 0.0
    %123 = vmatprep.subr.mxu0 0.0
    %124 = vmatpush1.msra.mxu0 0.0
    %125 = vmatprep.subr.mxu0 0.0
    %126 = vmatpush1.msra.mxu0 0.0
    %127 = vmatprep.subr.mxu0 0.0
    %128 = vmatpush1.msra.mxu0 0.0
    %129 = vmatprep.subr.mxu0 0.0
    %130 = vmatpush1.msra.mxu0 0.0
    %131 = vmatprep.subr.mxu0 0.0
    %132 = vmatpush1.msra.mxu0 0.0
    %133 = vmatprep.subr.mxu0 0.0
    %134 = vmatpush1.msra.mxu0 0.0
    %135 = vmatprep.subr.mxu0 0.0
    %136 = vmatpush1.msra.mxu0 %v105
    %137 = vmatprep.subr.mxu0 0.0
    %138 = vmatpush1.msra.mxu0 %v104
    %139 = vmatprep.subr.mxu0 0.0
    %140 = vmatpush1.msra.mxu0 %v103
    %141 = vmatprep.subr.mxu0 0.0
    %142 = vmatpush1.msra.mxu0 %v102
    %143 = vmatprep.subr.mxu0 0.0
    %144 = vmatpush2.msra.mxu0 0.0
    %145 = vmatprep.subr.mxu0 0.0
    %146 = vmatpush2.msra.mxu0 0.0
    %147 = vmatprep.subr.mxu0 0.0
    %148 = vmatpush2.msra.mxu0 0.0
    %149 = vmatprep.subr.mxu0 0.0
    %150 = vmatpush2.msra.mxu0 0.0
    %151 = vmatprep.subr.mxu0 0.0
    %152 = vmatpush2.msra.mxu0 0.0
    %153 = vmatprep.subr.mxu0 0.0
    %154 = vmatpush2.msra.mxu0 0.0
    %155 = vmatprep.subr.mxu0 0.0
    %156 = vmatpush2.msra.mxu0 0.0
    %157 = vmatprep.subr.mxu0 0.0
    %158 = vmatpush2.msra.mxu0 0.0
    %159 = vmatprep.subr.mxu0 0.0
    %160 = vmatpush2.msra.mxu0 0.0
    %161 = vmatprep.subr.mxu0 0.0
    %162 = vmatpush2.msra.mxu0 0.0
    %163 = vmatprep.subr.mxu0 0.0
    %164 = vmatpush2.msra.mxu0 0.0
    %165 = vmatprep.subr.mxu0 0.0
    %166 = vmatpush2.msra.mxu0 0.0
    %167 = vmatprep.subr.mxu0 0.0
    %168 = vmatpush2.msra.mxu0 0.0
    %169 = vmatprep.subr.mxu0 0.0
    %170 = vmatpush2.msra.mxu0 0.0
    %171 = vmatprep.subr.mxu0 0.0
    %172 = vmatpush2.msra.mxu0 0.0
    %173 = vmatprep.subr.mxu0 0.0
    %174 = vmatpush2.msra.mxu0 0.0
    %175 = vmatprep.mubr.f32.mxu0 0.0
    %176 = vmatmul.mubr.f32.gmra.mxu0 %v109
    %v177 = vpop.f32.mrf.mxu0
    %v178 = vadd.f32 0.0, %v177
    %v179 = vpop.f32.mrf.mxu0
    %180 = vdwg.mxu0
    %v181 = vadd.f32 %v107, %v178
    %v182 = vtanh.pop %v181
    %183 = vst.msk [vmem:[#allocation3] sm:$0xff] %vm100, %v182
    %184 = vst.msk [vmem:[#allocation4] sm:$0xff] %vm100, %v182
    %v185 = vld [vmem:[#allocation3] sm:$0xff]
    %v186 = vld [vmem:[%s4] sm:$0xff]
    %v187 = vld [vmem:[%s4 + $0x8] sm:$0xff]
    %v188 = vld [vmem:[%s4 + $0x10] sm:$0xff]
    %v189 = vld [vmem:[%s4 + $0x18] sm:$0xff]
    %v191 = vsel %vm100, %v185, 0
    %193 = vmatprep.subr.mxu0 0.0
    %194 = vmatpush1.msra.mxu0 0.0
    %195 = vmatprep.subr.mxu0 0.0
    %196 = vmatpush1.msra.mxu0 0.0
    %197 = vmatprep.subr.mxu0 0.0
    %198 = vmatpush1.msra.mxu0 0.0
    %199 = vmatprep.subr.mxu0 0.0
    %200 = vmatpush1.msra.mxu0 0.0
    %201 = vmatprep.subr.mxu0 0.0
    %202 = vmatpush1.msra.mxu0 0.0
    %203 = vmatprep.subr.mxu0 0.0
    %204 = vmatpush1.msra.mxu0 0.0
    %205 = vmatprep.subr.mxu0 0.0
    %206 = vmatpush1.msra.mxu0 0.0
    %207 = vmatprep.subr.mxu0 0.0
    %208 = vmatpush1.msra.mxu0 0.0
    %209 = vmatprep.subr.mxu0 0.0
    %210 = vmatpush1.msra.mxu0 0.0
    %211 = vmatprep.subr.mxu0 0.0
    %212 = vmatpush1.msra.mxu0 0.0
    %213 = vmatprep.subr.mxu0 0.0
    %214 = vmatpush1.msra.mxu0 0.0
    %215 = vmatprep.subr.mxu0 0.0
    %216 = vmatpush1.msra.mxu0 0.0
    %217 = vmatprep.subr.mxu0 0.0
    %218 = vmatpush1.msra.mxu0 %v189
    %219 = vmatprep.subr.mxu0 0.0
    %220 = vmatpush1.msra.mxu0 %v188
    %221 = vmatprep.subr.mxu0 0.0
    %222 = vmatpush1.msra.mxu0 %v187
    %223 = vmatprep.subr.mxu0 0.0
    %224 = vmatpush1.msra.mxu0 %v186
    %225 = vmatprep.subr.mxu0 0.0
    %226 = vmatpush2.msra.mxu0 0.0
    %227 = vmatprep.subr.mxu0 0.0
    %228 = vmatpush2.msra.mxu0 0.0
    %229 = vmatprep.subr.mxu0 0.0
    %230 = vmatpush2.msra.mxu0 0.0
    %231 = vmatprep.subr.mxu0 0.0
    %232 = vmatpush2.msra.mxu0 0.0
    %233 = vmatprep.subr.mxu0 0.0
    %234 = vmatpush2.msra.mxu0 0.0
    %235 = vmatprep.subr.mxu0 0.0
    %236 = vmatpush2.msra.mxu0 0.0
    %237 = vmatprep.subr.mxu0 0.0
    %238 = vmatpush2.msra.mxu0 0.0
    %239 = vmatprep.subr.mxu0 0.0
    %240 = vmatpush2.msra.mxu0 0.0
    %241 = vmatprep.subr.mxu0 0.0
    %242 = vmatpush2.msra.mxu0 0.0
    %243 = vmatprep.subr.mxu0 0.0
    %244 = vmatpush2.msra.mxu0 0.0
    %245 = vmatprep.subr.mxu0 0.0
    %246 = vmatpush2.msra.mxu0 0.0
    %247 = vmatprep.subr.mxu0 0.0
    %248 = vmatpush2.msra.mxu0 0.0
    %249 = vmatprep.subr.mxu0 0.0
    %250 = vmatpush2.msra.mxu0 0.0
    %251 = vmatprep.subr.mxu0 0.0
    %252 = vmatpush2.msra.mxu0 0.0
    %253 = vmatprep.subr.mxu0 0.0
    %254 = vmatpush2.msra.mxu0 0.0
    %255 = vmatprep.subr.mxu0 0.0
    %256 = vmatpush2.msra.mxu0 0.0
    %257 = vmatprep.mubr.f32.mxu0 0.0
    %258 = vmatmul.mubr.f32.gmra.mxu0 %v191
    %v259 = vpop.f32.mrf.mxu0
    %v260 = vadd.f32 0.0, %v259
    %v261 = vpop.f32.mrf.mxu0
    %262 = vdwg.mxu0
    %vm263 = vcmask 39936
    %264 = vst.msk [vmem:[%s5] sm:$0xff] %vm263, %v260
    // Predicated region
    $region22: #{actor_critic_forward.1} parent=1 // pred_check
      _
    $region23: #{actor_critic_forward.1} parent=1 // pred_check_branch
      %266 = sbr.rel (0) target = $region25
    $region24: #{actor_critic_forward.1} parent=1 // pred_region
      _
    $region25: #{actor_critic_forward.1} parent=1 // pred_fallthru
      _
    // Predicated region
    $region26: #{actor_critic_forward.1} parent=1 // pred_check
      _
    $region27: #{actor_critic_forward.1} parent=1 // pred_check_branch
      %268 = sbr.rel (0) target = $region29
    $region28: #{actor_critic_forward.1} parent=1 // pred_region
      %s270 = ssub.s32 128, 128
      %271 = vsyncadd [#allocation5], %s270
      %s273 = sshll.u32 [#allocation4], 4
      %s274 = int_to_ptr.vmem [resolvable:$true] %s273
      %276 = dma.vmem_to_hbm [thread:$0]  %s274, 128, %s6, [#allocation5]
    $region29: #{actor_critic_forward.1} parent=1 // pred_fallthru
      _
    // Predicated region
    $region30: #{actor_critic_forward.1} parent=1 // pred_check
      _
    $region31: #{actor_critic_forward.1} parent=1 // pred_check_branch
      %278 = sbr.rel (0) target = $region33
    $region32: #{actor_critic_forward.1} parent=1 // pred_region
      _
    $region33: #{actor_critic_forward.1} parent=1 // pred_fallthru
      _
    // Predicated region
    $region34: #{actor_critic_forward.1} parent=1 // pred_check
      _
    $region35: #{actor_critic_forward.1} parent=1 // pred_check_branch
      %280 = sbr.rel (0) target = $region37
    $region36: #{actor_critic_forward.1} parent=1 // pred_region
      %281 = dma.done [#allocation5], 128
    $region37: #{actor_critic_forward.1} parent=1 // pred_fallthru
      _
    %282 = vsyncpa [#allocation5], 1

</llo_original>
